<compile_context>
chip_gen: v5e
topology: v5e:2x2
jax: 0.10.0
libtpu: 0.0.40
codegen_flags: <defaults>
</compile_context>

<pallas_src>
from functools import partial

import jax
import jax.numpy as jnp
from jax import lax
from jax.experimental import pallas as pl
from jax.experimental.pallas import tpu as pltpu


# ----------------------------------------------------------------------------- kernel
def _rope_kernel(cos_ref, sin_ref, q_ref, k_ref, qo_ref, ko_ref, *, half, seg):
    # cos_ref/sin_ref: (TT, W) float32; sin already carries rotate_half's sign
    # pattern (folded wrapper-side), so no per-step mask / sign multiply here.
    cos = cos_ref[...]
    sin = sin_ref[...]
    w = q_ref.shape[-1]

    if w == seg:
        # One RoPE segment per lane row: rotate_half == circular roll by D/2
        # (direction-agnostic since the shift is half the period).
        def swap_halves(x):
            return pltpu.roll(x, shift=half, axis=2)
    else:
        # Lane-dense folded layout: several timesteps' D-wide segments share a
        # 128-wide lane row.  Swap halves within each segment using two XLU
        # rolls + one select; the mask is one vreg, built once and reused.
        lane = lax.broadcasted_iota(jnp.int32, (1, 1, w), 2)
        if (seg & (seg - 1)) == 0:
            seg_pos = lane & (seg - 1)
        else:
            seg_pos = lane % seg
        upper = seg_pos < half                 # these lanes take x[p + half]

        def swap_halves(x):
            fwd = pltpu.roll(x, shift=w - half, axis=2)   # x[(p + half) % w]
            bwd = pltpu.roll(x, shift=half, axis=2)       # x[(p - half) % w]
            return jnp.where(upper, fwd, bwd)

    # f32 math; the cos/sin broadcast (TT,W)->(G,TT,W) stays in vregs (checked
    # cheaply later if the bundle dump ever shows a materialized broadcast).
    q = q_ref[...].astype(jnp.float32)
    k = k_ref[...].astype(jnp.float32)
    qo_ref[...] = (q * cos + swap_halves(q) * sin).astype(qo_ref.dtype)
    ko_ref[...] = (k * cos + swap_halves(k) * sin).astype(ko_ref.dtype)


# ----------------------------------------------------------------------------- tiling
def _choose_tiles(bh, t_rows, width, itemsize):
    """Fixed, dtype-aligned (G, TT).  The grid uses pl.cdiv, so no divisibility
    is required; the last (ragged) block is masked on store by Pallas."""
    packing = max(8, 32 // max(1, itemsize))   # sublane rows per packed vreg group
    row_bytes = width * itemsize
    t_tile_budget = 512 * 1024                 # bytes of one (TT, W) row block
    per_tile_budget = 2 * 1024 * 1024          # per q/k tile (8 live tiles -> ~16 MiB)

    if t_rows * row_bytes <= t_tile_budget:
        tt = t_rows                            # full T extent: always a legal block dim
    else:
        tt = max(packing, (t_tile_budget // row_bytes) // packing * packing)
        tt = min(tt, t_rows)
    g = int(max(1, min(bh, per_tile_budget // max(1, tt * row_bytes))))
    return g, tt


# ----------------------------------------------------------------------------- wrapper
def build_rope_cache(head_size, max_seq_len, base=10000, scale=1.0):
    # Matches RotaryEmbedding._rope_init / build_rope_cache.
    inv_freq = 1.0 / (
        scale * base ** (jnp.arange(0, head_size, 2, dtype=jnp.float32) / head_size)
    )
    t = jnp.arange(max_seq_len, dtype=jnp.float32)
    freqs = jnp.outer(t, inv_freq).astype(jnp.float32)        # (S, D/2)
    emb = jnp.concatenate([freqs, freqs], axis=-1)             # (S, D)
    return jnp.cos(emb), jnp.sin(emb)                          # f32, f32


@partial(jax.jit, static_argnames=("alias_qk",))
def rotary_embedding_forward(q, k, cos_cached, sin_cached, *, alias_qk=False):
    """q, k: (B, H, T, D). Returns (q_out, k_out) with the same shape/dtype.

    alias_qk=True writes q_out/k_out in place of q/k inside the pallas_call.
    Only safe when the caller donates q/k (jit donate) and never reads them
    afterwards; leave False otherwise.
    """
    B, H, T, D = q.shape
    out_dtype = q.dtype
    assert D % 2 == 0, "RoPE requires an even head_size"
    assert T <= cos_cached.shape[0], "seq_len exceeds the RoPE cache"

    half = D // 2

    # Fold several timesteps into one 128-wide lane row when D < 128 (free,
    # row-major-preserving reshape) so every load/store is lane-dense.  If T
    # is not a fold multiple, pad T (one extra q/k copy, still cheaper than
    # masked partial stores on every output row).
    fold = 128 // D if (D < 128 and 128 % D == 0) else 1
    Tp = ((T + fold - 1) // fold) * fold
    pad_t = Tp - T
    if pad_t:
        pad_cfg = ((0, 0), (0, 0), (0, pad_t), (0, 0))
        q = jnp.pad(q, pad_cfg)
        k = jnp.pad(k, pad_cfg)

    W = fold * D
    Tf = Tp // fold
    BH = B * H

    # Fold rotate_half's sign into the sin cache (once, outside the grid loop):
    # sin_signed = concat(-sin[:, :D/2], sin[:, D/2:]).  cos/sin stay float32.
    sign = jnp.concatenate([jnp.full((half,), -1.0, jnp.float32),
                            jnp.ones((half,), jnp.float32)])
    cos = cos_cached[:T].astype(jnp.float32)
    sin = sin_cached[:T].astype(jnp.float32) * sign
    if pad_t:
        cos = jnp.pad(cos, ((0, pad_t), (0, 0)))
        sin = jnp.pad(sin, ((0, pad_t), (0, 0)))
    cos = cos.reshape(Tf, W)
    sin = sin.reshape(Tf, W)

    qf = q.reshape(BH, Tf, W)
    kf = k.reshape(BH, Tf, W)

    G, TT = _choose_tiles(BH, Tf, W, out_dtype.itemsize)

    # BH is the fastest grid axis; the cos/sin block index depends only on the
    # (slow) T-block axis, so Pallas skips their DMA across the inner BH loop.
    grid = (pl.cdiv(Tf, TT), pl.cdiv(BH, G))
    qk_spec = pl.BlockSpec((G, TT, W), lambda j, i: (i, j, 0))
    cs_spec = pl.BlockSpec((TT, W), lambda j, i: (j, 0))

    kernel = partial(_rope_kernel, half=half, seg=D)

    q_out, k_out = pl.pallas_call(
        kernel,
        out_shape=(jax.ShapeDtypeStruct((BH, Tf, W), out_dtype),
                   jax.ShapeDtypeStruct((BH, Tf, W), out_dtype)),
        grid_spec=pltpu.PrefetchScalarGridSpec(
            num_scalar_prefetch=0,
            grid=grid,
            in_specs=[cs_spec, cs_spec, qk_spec, qk_spec],
            out_specs=[qk_spec, qk_spec],
        ),
        compiler_params=pltpu.CompilerParams(
            dimension_semantics=("parallel", "parallel"),
            # Tiles are bounded to ~20 MiB of double-buffered working set;
            # 40 MiB leaves headroom under v7x's 64 MiB physical VMEM.
            vmem_limit_bytes=40 * 1024 * 1024,
        ),
        input_output_aliases=({2: 0, 3: 1} if alias_qk else {}),
    )(cos, sin, qf, kf)

    q_out = q_out.reshape(B, H, Tp, D)
    k_out = k_out.reshape(B, H, Tp, D)
    if pad_t:
        q_out = q_out[:, :, :T]
        k_out = k_out[:, :, :T]
    return q_out, k_out


# ----------------------------------------------------------------------------- reference
def _reference(q, k, cos_cached, sin_cached):
    # Pure-JAX reference reproducing the PyTorch forward (input_pos=None).
    dtype = q.dtype
    qf = q.astype(jnp.float32)
    kf = k.astype(jnp.float32)
    T = q.shape[2]
    cos = cos_cached[None, None, :T, :]
    sin = sin_cached[None, None, :T, :]

    def rotate_half(x):
        d = x.shape[-1]
        x1, x2 = x[..., : d // 2], x[..., d // 2:]
        return jnp.concatenate([-x2, x1], axis=-1)

    q_out = qf * cos + rotate_half(qf) * sin
    k_out = kf * cos + rotate_half(kf) * sin
    return q_out.astype(dtype), k_out.astype(dtype)


if __name__ == "__main__":
    max_seq_len = 16
    base, scale = 10000, 1.0
    key = jax.random.PRNGKey(0)

    cases = [
        # (B, H, T, D, dtype)
        (2, 4, 8, 64, jnp.bfloat16),    # folded lane-dense path (fold=2)
        (1, 2, 8, 128, jnp.float32),    # full-row roll path (w == seg)
        (1, 2, 5, 64, jnp.bfloat16),    # ragged T -> wrapper pads to a fold multiple
    ]

    ok = True
    for (B, H, T, D, dtype) in cases:
        key, kq, kk = jax.random.split(key, 3)
        q = jax.random.normal(kq, (B, H, T, D), dtype=jnp.float32).astype(dtype)
        k = jax.random.normal(kk, (B, H, T, D), dtype=jnp.float32).astype(dtype)
        cos_cached, sin_cached = build_rope_cache(D, max_seq_len, base, scale)

        q_out, k_out = rotary_embedding_forward(q, k, cos_cached, sin_cached)
        jax.block_until_ready((q_out, k_out))

        q_ref, k_ref = _reference(q, k, cos_cached, sin_cached)
        assert q_out.shape == q.shape and k_out.shape == k.shape
        assert q_out.dtype == q.dtype and k_out.dtype == q.dtype
        ok &= bool(jnp.allclose(q_out.astype(jnp.float32), q_ref.astype(jnp.float32),
                                atol=1e-2, rtol=1e-2))
        ok &= bool(jnp.allclose(k_out.astype(jnp.float32), k_ref.astype(jnp.float32),
                                atol=1e-2, rtol=1e-2))

    assert ok, "kernel output mismatch vs pure-JAX reference"
    print("KERNEL_OK")
</pallas_src>

<mosaic_0001>
module attributes {stable_mosaic.version = 11 : i64} {
  func.func @_rope_kernel(%arg0: i32, %arg1: i32, %arg2: memref<4x128xf32, #tpu.memory_space<vmem>>, %arg3: memref<4x128xf32, #tpu.memory_space<vmem>>, %arg4: memref<8x4x128xbf16, #tpu.memory_space<vmem>>, %arg5: memref<8x4x128xbf16, #tpu.memory_space<vmem>>, %arg6: memref<8x4x128xbf16, #tpu.memory_space<vmem>>, %arg7: memref<8x4x128xbf16, #tpu.memory_space<vmem>>) attributes {dimension_semantics = [#tpu.dimension_semantics<parallel>, #tpu.dimension_semantics<parallel>], iteration_bounds = array<i64: 1, 1>, scalar_prefetch = 0 : i64, scratch_operands = 0 : i64, tpu.core_type = #tpu.core_type<tc>, window_params = [{transform_indices = @transform_0, window_bounds = array<i64: 4, 128>}, {transform_indices = @transform_1, window_bounds = array<i64: 4, 128>}, {transform_indices = @transform_2, window_bounds = array<i64: 8, 4, 128>}, {transform_indices = @transform_3, window_bounds = array<i64: 8, 4, 128>}, {transform_indices = @transform_4, window_bounds = array<i64: 8, 4, 128>}, {transform_indices = @transform_5, window_bounds = array<i64: 8, 4, 128>}]} {
    %c0 = arith.constant 0 : index
    %c0_0 = arith.constant 0 : index
    %0 = vector.load %arg2[%c0, %c0_0] : memref<4x128xf32, #tpu.memory_space<vmem>>, vector<4x128xf32>
    %c0_1 = arith.constant 0 : index
    %c0_2 = arith.constant 0 : index
    %1 = vector.load %arg3[%c0_1, %c0_2] : memref<4x128xf32, #tpu.memory_space<vmem>>, vector<4x128xf32>
    %2 = tpu.iota {dimensions = array<i32: 2>} : vector<1x1x128xi32>
    %c63_i32 = arith.constant 63 : i32
    %3 = vector.broadcast %c63_i32 : i32 to vector<1x1x128xi32>
    %4 = arith.andi %2, %3 : vector<1x1x128xi32>
    %c32_i32 = arith.constant 32 : i32
    %5 = vector.broadcast %c32_i32 : i32 to vector<1x1x128xi32>
    %6 = arith.cmpi slt, %4, %5 : vector<1x1x128xi32>
    %c0_3 = arith.constant 0 : index
    %c0_4 = arith.constant 0 : index
    %c0_5 = arith.constant 0 : index
    %7 = vector.load %arg4[%c0_3, %c0_4, %c0_5] : memref<8x4x128xbf16, #tpu.memory_space<vmem>>, vector<8x4x128xbf16>
    %8 = arith.extf %7 : vector<8x4x128xbf16> to vector<8x4x128xf32>
    %c0_6 = arith.constant 0 : index
    %c0_7 = arith.constant 0 : index
    %c0_8 = arith.constant 0 : index
    %9 = vector.load %arg5[%c0_6, %c0_7, %c0_8] : memref<8x4x128xbf16, #tpu.memory_space<vmem>>, vector<8x4x128xbf16>
    %10 = arith.extf %9 : vector<8x4x128xbf16> to vector<8x4x128xf32>
    %11 = vector.shape_cast %0 : vector<4x128xf32> to vector<1x4x128xf32>
    %12 = vector.broadcast %11 : vector<1x4x128xf32> to vector<8x4x128xf32>
    %13 = arith.mulf %8, %12 : vector<8x4x128xf32>
    %c96_i32 = arith.constant 96 : i32
    %14 = tpu.dynamic_rotate %8 by %c96_i32 dim 2 : vector<8x4x128xf32>, i32 -> vector<8x4x128xf32>
    %c32_i32_9 = arith.constant 32 : i32
    %15 = tpu.dynamic_rotate %8 by %c32_i32_9 dim 2 : vector<8x4x128xf32>, i32 -> vector<8x4x128xf32>
    %16 = vector.shape_cast %6 : vector<1x1x128xi1> to vector<1x1x128xi1>
    %17 = vector.broadcast %16 : vector<1x1x128xi1> to vector<8x4x128xi1>
    %18 = arith.select %17, %14, %15 : vector<8x4x128xi1>, vector<8x4x128xf32>
    %19 = vector.shape_cast %1 : vector<4x128xf32> to vector<1x4x128xf32>
    %20 = vector.broadcast %19 : vector<1x4x128xf32> to vector<8x4x128xf32>
    %21 = arith.mulf %18, %20 : vector<8x4x128xf32>
    %22 = arith.addf %13, %21 : vector<8x4x128xf32>
    %23 = arith.truncf %22 : vector<8x4x128xf32> to vector<8x4x128xbf16>
    %c0_10 = arith.constant 0 : index
    %c0_11 = arith.constant 0 : index
    %c0_12 = arith.constant 0 : index
    %24 = vector.load %arg6[%c0_10, %c0_11, %c0_12] : memref<8x4x128xbf16, #tpu.memory_space<vmem>>, vector<8x4x128xbf16>
    tpu.vector_store %arg6[%c0_10, %c0_11, %c0_12], %23 {strides = array<i32>} : memref<8x4x128xbf16, #tpu.memory_space<vmem>>, vector<8x4x128xbf16>,
    %25 = vector.shape_cast %0 : vector<4x128xf32> to vector<1x4x128xf32>
    %26 = vector.broadcast %25 : vector<1x4x128xf32> to vector<8x4x128xf32>
    %27 = arith.mulf %10, %26 : vector<8x4x128xf32>
    %c96_i32_13 = arith.constant 96 : i32
    %28 = tpu.dynamic_rotate %10 by %c96_i32_13 dim 2 : vector<8x4x128xf32>, i32 -> vector<8x4x128xf32>
    %c32_i32_14 = arith.constant 32 : i32
    %29 = tpu.dynamic_rotate %10 by %c32_i32_14 dim 2 : vector<8x4x128xf32>, i32 -> vector<8x4x128xf32>
    %30 = vector.shape_cast %6 : vector<1x1x128xi1> to vector<1x1x128xi1>
    %31 = vector.broadcast %30 : vector<1x1x128xi1> to vector<8x4x128xi1>
    %32 = arith.select %31, %28, %29 : vector<8x4x128xi1>, vector<8x4x128xf32>
    %33 = vector.shape_cast %1 : vector<4x128xf32> to vector<1x4x128xf32>
    %34 = vector.broadcast %33 : vector<1x4x128xf32> to vector<8x4x128xf32>
    %35 = arith.mulf %32, %34 : vector<8x4x128xf32>
    %36 = arith.addf %27, %35 : vector<8x4x128xf32>
    %37 = arith.truncf %36 : vector<8x4x128xf32> to vector<8x4x128xbf16>
    %c0_15 = arith.constant 0 : index
    %c0_16 = arith.constant 0 : index
    %c0_17 = arith.constant 0 : index
    %38 = vector.load %arg7[%c0_15, %c0_16, %c0_17] : memref<8x4x128xbf16, #tpu.memory_space<vmem>>, vector<8x4x128xbf16>
    tpu.vector_store %arg7[%c0_15, %c0_16, %c0_17], %37 {strides = array<i32>} : memref<8x4x128xbf16, #tpu.memory_space<vmem>>, vector<8x4x128xbf16>,
    return
  }
  func.func @transform_0(%arg0: i32, %arg1: i32) -> (i32, i32) {
    %c0_i32 = arith.constant 0 : i32
    %c0_i32_0 = arith.constant 0 : i32
    return %arg0, %c0_i32 : i32, i32
  }
  func.func @transform_1(%arg0: i32, %arg1: i32) -> (i32, i32) {
    %c0_i32 = arith.constant 0 : i32
    %c0_i32_0 = arith.constant 0 : i32
    return %arg0, %c0_i32 : i32, i32
  }
  func.func @transform_2(%arg0: i32, %arg1: i32) -> (i32, i32, i32) {
    %c0_i32 = arith.constant 0 : i32
    %c0_i32_0 = arith.constant 0 : i32
    return %arg1, %arg0, %c0_i32 : i32, i32, i32
  }
  func.func @transform_3(%arg0: i32, %arg1: i32) -> (i32, i32, i32) {
    %c0_i32 = arith.constant 0 : i32
    %c0_i32_0 = arith.constant 0 : i32
    return %arg1, %arg0, %c0_i32 : i32, i32, i32
  }
  func.func @transform_4(%arg0: i32, %arg1: i32) -> (i32, i32, i32) {
    %c0_i32 = arith.constant 0 : i32
    %c0_i32_0 = arith.constant 0 : i32
    return %arg1, %arg0, %c0_i32 : i32, i32, i32
  }
  func.func @transform_5(%arg0: i32, %arg1: i32) -> (i32, i32, i32) {
    %c0_i32 = arith.constant 0 : i32
    %c0_i32_0 = arith.constant 0 : i32
    return %arg1, %arg0, %c0_i32 : i32, i32, i32
  }
}

</mosaic_0001>

<llo_original>
// kernel: rotary_embedding_forward.1
$region0: #{rotary_embedding_forward.1}
  #allocation0 [shape = 'u32[]', space=smem, size = 0x4, offset = 0x4, fixed_abs, tag = 'smem constant byte address 0x4 - core index']
  #allocation1 [shape = 'u32[72,128]{1,0:T(1,128)}', space=vmem, size = 0x9000, scoped, tag = 'internal scratch']
  %s0 = inlined_call_operand.vmem [shape: f32[4,128], index: 0, kind: input, shape index: {}]
  %s1 = inlined_call_operand.vmem [shape: f32[4,128], index: 1, kind: input, shape index: {}]
  %s2 = inlined_call_operand.vmem [shape: bf16[8,4,128], index: 2, kind: input, shape index: {}]
  %s3 = inlined_call_operand.vmem [shape: bf16[8,4,128], index: 3, kind: input, shape index: {}]
  %s4 = inlined_call_operand.vmem [shape: bf16[8,4,128], index: 4, kind: output, shape index: {0}]
  %s5 = inlined_call_operand.vmem [shape: bf16[8,4,128], index: 5, kind: output, shape index: {1}]
  %6 = xla_tuple %s4, %s5
  %s7 = sld [smem:[#allocation0]]
  $region34: #{rotary_embedding_forward.1} parent=0
    _
  %s9 = ssub.s32 1, %s7
  %s10 = scalar_select 0, %s9, %s7
  // Predicated region
  $region2: #{rotary_embedding_forward.1} parent=0 // pred_check
    _
  $region3: #{rotary_embedding_forward.1} parent=0 // pred_check_branch
    %12 = sbr.rel (0) target = $region5
  $region4: #{rotary_embedding_forward.1} parent=0 // pred_region
    _
  $region5: #{rotary_embedding_forward.1} parent=0 // pred_fallthru
    _
  // Predicated region
  $region6: #{rotary_embedding_forward.1} parent=0 // pred_check
    _
  $region7: #{rotary_embedding_forward.1} parent=0 // pred_check_branch
    %14 = sbr.rel (0) target = $region9
  $region8: #{rotary_embedding_forward.1} parent=0 // pred_region
    _
  $region9: #{rotary_embedding_forward.1} parent=0 // pred_fallthru
    _
  // Predicated region
  $region10: #{rotary_embedding_forward.1} parent=0 // pred_check
    _
  $region11: #{rotary_embedding_forward.1} parent=0 // pred_check_branch
    %16 = sbr.rel (0) target = $region13
  $region12: #{rotary_embedding_forward.1} parent=0 // pred_region
    _
  $region13: #{rotary_embedding_forward.1} parent=0 // pred_fallthru
    _
  // Predicated region
  $region14: #{rotary_embedding_forward.1} parent=0 // pred_check
    _
  $region15: #{rotary_embedding_forward.1} parent=0 // pred_check_branch
    %18 = sbr.rel (0) target = $region17
  $region16: #{rotary_embedding_forward.1} parent=0 // pred_region
    _
  $region17: #{rotary_embedding_forward.1} parent=0 // pred_fallthru
    _
  %v19 = vld [vmem:[%s0] sm:$0xf]
  %v20 = vld [vmem:[%s1] sm:$0xf]
  %v21 = vlaneseq
  %v22 = vand.u32 %v21, 127
  %v23 = vand.u32 %v22, 63
  %vm24 = vcmp.lt.s32.totalorder %v23, 32
  %v25 = vld [vmem:[%s2] sm:$0x3]
  %v26 = vld [vmem:[%s2 + $0x2] sm:$0x3]
  %v27 = vld [vmem:[%s2 + $0x4] sm:$0x3]
  %v28 = vld [vmem:[%s2 + $0x6] sm:$0x3]
  %v29 = vld [vmem:[%s2 + $0x8] sm:$0x3]
  %v30 = vld [vmem:[%s2 + $0xa] sm:$0x3]
  %v31 = vld [vmem:[%s2 + $0xc] sm:$0x3]
  %v32 = vld [vmem:[%s2 + $0xe] sm:$0x3]
  %v33 = vunpack.c.l.bf16 %v25
  %v34 = vunpack.c.l.bf16 %v26
  %v35 = vunpack.c.l.bf16 %v27
  %v36 = vunpack.c.l.bf16 %v28
  %v37 = vunpack.c.l.bf16 %v29
  %v38 = vunpack.c.l.bf16 %v30
  %v39 = vunpack.c.l.bf16 %v31
  %v40 = vunpack.c.l.bf16 %v32
  %v41 = vld [vmem:[%s3] sm:$0x3]
  %v42 = vld [vmem:[%s3 + $0x2] sm:$0x3]
  %v43 = vld [vmem:[%s3 + $0x4] sm:$0x3]
  %v44 = vld [vmem:[%s3 + $0x6] sm:$0x3]
  %v45 = vld [vmem:[%s3 + $0x8] sm:$0x3]
  %v46 = vld [vmem:[%s3 + $0xa] sm:$0x3]
  %v47 = vld [vmem:[%s3 + $0xc] sm:$0x3]
  %v48 = vld [vmem:[%s3 + $0xe] sm:$0x3]
  %v49 = vunpack.c.l.bf16 %v41
  %v50 = vunpack.c.l.bf16 %v42
  %v51 = vunpack.c.l.bf16 %v43
  %v52 = vunpack.c.l.bf16 %v44
  %v53 = vunpack.c.l.bf16 %v45
  %v54 = vunpack.c.l.bf16 %v46
  %v55 = vunpack.c.l.bf16 %v47
  %v56 = vunpack.c.l.bf16 %v48
  %v57 = vmul.f32 %v33, %v19
  %v58 = vmul.f32 %v34, %v19
  %v59 = vmul.f32 %v35, %v19
  %v60 = vmul.f32 %v36, %v19
  %v61 = vmul.f32 %v37, %v19
  %v62 = vmul.f32 %v38, %v19
  %v63 = vmul.f32 %v39, %v19
  %v64 = vmul.f32 %v40, %v19
  %65 = vrot.lane.b32.xlu0 %v33, 96
  %v66 = vpop.permute.xlu0 %65
  %67 = vrot.lane.b32.xlu0 %v34, 96
  %v68 = vpop.permute.xlu0 %67
  %69 = vrot.lane.b32.xlu0 %v35, 96
  %v70 = vpop.permute.xlu0 %69
  %71 = vrot.lane.b32.xlu0 %v36, 96
  %v72 = vpop.permute.xlu0 %71
  %73 = vrot.lane.b32.xlu0 %v37, 96
  %v74 = vpop.permute.xlu0 %73
  %75 = vrot.lane.b32.xlu0 %v38, 96
  %v76 = vpop.permute.xlu0 %75
  %77 = vrot.lane.b32.xlu0 %v39, 96
  %v78 = vpop.permute.xlu0 %77
  %79 = vrot.lane.b32.xlu0 %v40, 96
  %v80 = vpop.permute.xlu0 %79
  %81 = vrot.lane.b32.xlu0 %v33, 32
  %v82 = vpop.permute.xlu0 %81
  %83 = vrot.lane.b32.xlu0 %v34, 32
  %v84 = vpop.permute.xlu0 %83
  %85 = vrot.lane.b32.xlu0 %v35, 32
  %v86 = vpop.permute.xlu0 %85
  %87 = vrot.lane.b32.xlu0 %v36, 32
  %v88 = vpop.permute.xlu0 %87
  %89 = vrot.lane.b32.xlu0 %v37, 32
  %v90 = vpop.permute.xlu0 %89
  %91 = vrot.lane.b32.xlu0 %v38, 32
  %v92 = vpop.permute.xlu0 %91
  %93 = vrot.lane.b32.xlu0 %v39, 32
  %v94 = vpop.permute.xlu0 %93
  %95 = vrot.lane.b32.xlu0 %v40, 32
  %v96 = vpop.permute.xlu0 %95
  %v97 = vsel %vm24, 1, 0
  %vm98 = vcmp.eq.s32.totalorder %v97, 1
  %v99 = vsel %vm98, %v66, %v82
  %v100 = vsel %vm98, %v68, %v84
  %v101 = vsel %vm98, %v70, %v86
  %v102 = vsel %vm98, %v72, %v88
  %v103 = vsel %vm98, %v74, %v90
  %v104 = vsel %vm98, %v76, %v92
  %v105 = vsel %vm98, %v78, %v94
  %v106 = vsel %vm98, %v80, %v96
  %v107 = vmul.f32 %v99, %v20
  %v108 = vmul.f32 %v100, %v20
  %v109 = vmul.f32 %v101, %v20
  %v110 = vmul.f32 %v102, %v20
  %v111 = vmul.f32 %v103, %v20
  %v112 = vmul.f32 %v104, %v20
  %v113 = vmul.f32 %v105, %v20
  %v114 = vmul.f32 %v106, %v20
  %v115 = vadd.f32 %v57, %v107
  %v116 = vadd.f32 %v58, %v108
  %v117 = vadd.f32 %v59, %v109
  %v118 = vadd.f32 %v60, %v110
  %v119 = vadd.f32 %v61, %v111
  %v120 = vadd.f32 %v62, %v112
  %v121 = vadd.f32 %v63, %v113
  %v122 = vadd.f32 %v64, %v114
  %v123 = vpack.c.bf16 %v115, %v115
  %v124 = vpack.c.bf16 %v116, %v116
  %v125 = vpack.c.bf16 %v117, %v117
  %v126 = vpack.c.bf16 %v118, %v118
  %v127 = vpack.c.bf16 %v119, %v119
  %v128 = vpack.c.bf16 %v120, %v120
  %v129 = vpack.c.bf16 %v121, %v121
  %v130 = vpack.c.bf16 %v122, %v122
  %131 = vst [vmem:[%s4] sm:$0x3] %v123
  %132 = vst [vmem:[%s4 + $0x2] sm:$0x3] %v124
  %133 = vst [vmem:[%s4 + $0x4] sm:$0x3] %v125
  %134 = vst [vmem:[%s4 + $0x6] sm:$0x3] %v126
  %135 = vst [vmem:[%s4 + $0x8] sm:$0x3] %v127
  %136 = vst [vmem:[%s4 + $0xa] sm:$0x3] %v128
  %137 = vst [vmem:[%s4 + $0xc] sm:$0x3] %v129
  %138 = vst [vmem:[%s4 + $0xe] sm:$0x3] %v130
  %v139 = vmul.f32 %v49, %v19
  %v140 = vmul.f32 %v50, %v19
  %v141 = vmul.f32 %v51, %v19
  %v142 = vmul.f32 %v52, %v19
  %v143 = vmul.f32 %v53, %v19
  %v144 = vmul.f32 %v54, %v19
  %v145 = vmul.f32 %v55, %v19
  %v146 = vmul.f32 %v56, %v19
  %147 = vrot.lane.b32.xlu0 %v49, 96
  %v148 = vpop.permute.xlu0 %147
  %149 = vrot.lane.b32.xlu0 %v50, 96
  %v150 = vpop.permute.xlu0 %149
  %151 = vrot.lane.b32.xlu0 %v51, 96
  %v152 = vpop.permute.xlu0 %151
  %153 = vrot.lane.b32.xlu0 %v52, 96
  %v154 = vpop.permute.xlu0 %153
  %155 = vrot.lane.b32.xlu0 %v53, 96
  %v156 = vpop.permute.xlu0 %155
  %157 = vrot.lane.b32.xlu0 %v54, 96
  %v158 = vpop.permute.xlu0 %157
  %159 = vrot.lane.b32.xlu0 %v55, 96
  %v160 = vpop.permute.xlu0 %159
  %161 = vrot.lane.b32.xlu0 %v56, 96
  %v162 = vpop.permute.xlu0 %161
  %163 = vrot.lane.b32.xlu0 %v49, 32
  %v164 = vpop.permute.xlu0 %163
  %165 = vrot.lane.b32.xlu0 %v50, 32
  %v166 = vpop.permute.xlu0 %165
  %167 = vrot.lane.b32.xlu0 %v51, 32
  %v168 = vpop.permute.xlu0 %167
  %169 = vrot.lane.b32.xlu0 %v52, 32
  %v170 = vpop.permute.xlu0 %169
  %171 = vrot.lane.b32.xlu0 %v53, 32
  %v172 = vpop.permute.xlu0 %171
  %173 = vrot.lane.b32.xlu0 %v54, 32
  %v174 = vpop.permute.xlu0 %173
  %175 = vrot.lane.b32.xlu0 %v55, 32
  %v176 = vpop.permute.xlu0 %175
  %177 = vrot.lane.b32.xlu0 %v56, 32
  %v178 = vpop.permute.xlu0 %177
  %v179 = vsel %vm98, %v148, %v164
  %v180 = vsel %vm98, %v150, %v166
  %v181 = vsel %vm98, %v152, %v168
  %v182 = vsel %vm98, %v154, %v170
  %v183 = vsel %vm98, %v156, %v172
  %v184 = vsel %vm98, %v158, %v174
  %v185 = vsel %vm98, %v160, %v176
  %v186 = vsel %vm98, %v162, %v178
  %v187 = vmul.f32 %v179, %v20
  %v188 = vmul.f32 %v180, %v20
  %v189 = vmul.f32 %v181, %v20
  %v190 = vmul.f32 %v182, %v20
  %v191 = vmul.f32 %v183, %v20
  %v192 = vmul.f32 %v184, %v20
  %v193 = vmul.f32 %v185, %v20
  %v194 = vmul.f32 %v186, %v20
  %v195 = vadd.f32 %v139, %v187
  %v196 = vadd.f32 %v140, %v188
  %v197 = vadd.f32 %v141, %v189
  %v198 = vadd.f32 %v142, %v190
  %v199 = vadd.f32 %v143, %v191
  %v200 = vadd.f32 %v144, %v192
  %v201 = vadd.f32 %v145, %v193
  %v202 = vadd.f32 %v146, %v194
  %v203 = vpack.c.bf16 %v195, %v195
  %v204 = vpack.c.bf16 %v196, %v196
  %v205 = vpack.c.bf16 %v197, %v197
  %v206 = vpack.c.bf16 %v198, %v198
  %v207 = vpack.c.bf16 %v199, %v199
  %v208 = vpack.c.bf16 %v200, %v200
  %v209 = vpack.c.bf16 %v201, %v201
  %v210 = vpack.c.bf16 %v202, %v202
  %211 = vst [vmem:[%s5] sm:$0x3] %v203
  %212 = vst [vmem:[%s5 + $0x2] sm:$0x3] %v204
  %213 = vst [vmem:[%s5 + $0x4] sm:$0x3] %v205
  %214 = vst [vmem:[%s5 + $0x6] sm:$0x3] %v206
  %215 = vst [vmem:[%s5 + $0x8] sm:$0x3] %v207
  %216 = vst [vmem:[%s5 + $0xa] sm:$0x3] %v208
  %217 = vst [vmem:[%s5 + $0xc] sm:$0x3] %v209
  %218 = vst [vmem:[%s5 + $0xe] sm:$0x3] %v210
  // Predicated region
  $region18: #{rotary_embedding_forward.1} parent=0 // pred_check
    _
  $region19: #{rotary_embedding_forward.1} parent=0 // pred_check_branch
    %220 = sbr.rel (0) target = $region21
  $region20: #{rotary_embedding_forward.1} parent=0 // pred_region
    _
  $region21: #{rotary_embedding_forward.1} parent=0 // pred_fallthru
    _
  // Predicated region
  $region22: #{rotary_embedding_forward.1} parent=0 // pred_check
    _
  $region23: #{rotary_embedding_forward.1} parent=0 // pred_check_branch
    %222 = sbr.rel (0) target = $region25
  $region24: #{rotary_embedding_forward.1} parent=0 // pred_region
    _
  $region25: #{rotary_embedding_forward.1} parent=0 // pred_fallthru
    _
  // Predicated region
  $region26: #{rotary_embedding_forward.1} parent=0 // pred_check
    _
  $region27: #{rotary_embedding_forward.1} parent=0 // pred_check_branch
    %224 = sbr.rel (0) target = $region29
  $region28: #{rotary_embedding_forward.1} parent=0 // pred_region
    _
  $region29: #{rotary_embedding_forward.1} parent=0 // pred_fallthru
    _
  // Predicated region
  $region30: #{rotary_embedding_forward.1} parent=0 // pred_check
    _
  $region31: #{rotary_embedding_forward.1} parent=0 // pred_check_branch
    %226 = sbr.rel (0) target = $region33
  $region32: #{rotary_embedding_forward.1} parent=0 // pred_region
    _
  $region33: #{rotary_embedding_forward.1} parent=0 // pred_fallthru
    _

</llo_original>
